<compile_context>
chip_gen: v7x
topology: tpu7x:2x2x1
jax: 0.10.0
libtpu: 0.0.40
codegen_flags: <defaults>
</compile_context>

<pallas_src>
import functools

import jax
import jax.numpy as jnp
from jax.experimental import pallas as pl
from jax.experimental.pallas import tpu as pltpu

LANES = 128
MAX_TILE_ROWS = 2048   # 2048 x 128 x 4B = 1 MiB per buffer; 2 inputs x 2 bufs = 4 MiB


def _nss_kernel(sal_ref, fix_ref, out_ref, acc_ref,
                *, n_valid, n_rows, tile_rows):
    i = pl.program_id(0)

    @pl.when(i == 0)
    def _init():
        acc_ref[...] = jnp.zeros_like(acc_ref)

    x = sal_ref[...].astype(jnp.float32)              # (tile_rows, 128)
    f = fix_ref[...].astype(jnp.float32) > 0.5        # fixation mask

    # Mask rows beyond the real array (only needed when the grid overruns; the
    # mask is applied to x itself before squaring/summing so unspecified
    # out-of-bounds block contents can never leak into the accumulators).
    if n_rows % tile_rows != 0:
        row_ids = jax.lax.broadcasted_iota(jnp.int32, (tile_rows, LANES), 0)
        valid = (i * tile_rows + row_ids) < n_rows
        x = jnp.where(valid, x, 0.0)
        f = jnp.logical_and(f, valid)

    xm = jnp.where(f, x, 0.0)          # masked values
    cm = jnp.where(f, 1.0, 0.0)        # masked count contribution

    # Fold (tile_rows, 128) -> (8, 128): pure VPU adds across vreg tiles
    # (no cross-lane/sublane XLU work in the per-step path).
    def fold(v):
        return jnp.sum(v.reshape(tile_rows // 8, 8, LANES), axis=0)

    acc_ref[0] += fold(x)              # sum(x)
    acc_ref[1] += fold(x * x)          # sum(x^2)
    acc_ref[2] += fold(xm)             # masked sum(x)
    acc_ref[3] += fold(cm)             # masked count

    @pl.when(i == pl.num_programs(0) - 1)
    def _finalize():
        # Single cross-lane/sublane reduction per accumulator, once per kernel.
        s = jnp.sum(acc_ref[0], keepdims=True)    # (1, 1)
        ss = jnp.sum(acc_ref[1], keepdims=True)
        ms = jnp.sum(acc_ref[2], keepdims=True)
        mc = jnp.sum(acc_ref[3], keepdims=True)

        n = jnp.float32(n_valid)
        mean = s / n
        var = (ss - n * mean * mean) / (n - 1.0)  # unbiased, like torch.std
        std = jnp.sqrt(var)
        out_ref[...] = (ms / mc - mean) / std


def nss_loss(sal_map, fix, *, max_tile_rows=MAX_TILE_ROWS):
    """Pallas NSS loss. sal_map/fix: same shape (e.g. NCHW). Returns scalar f32."""
    assert sal_map.shape == fix.shape, "only the equal-size branch is implemented"
    n_valid = sal_map.size
    assert n_valid > 1

    # Flatten (free, layout-compatible). Keep original dtypes; cast in-kernel.
    sal_flat = jnp.ravel(sal_map)
    fix_flat = jnp.ravel(fix)

    # Pad only if numel is not a multiple of 8*128 (keeps rows a multiple of 8).
    # Zero padding is neutral for every accumulator (pad fix=0 => never selected;
    # pad sal=0 => adds 0 to sum / sum-of-squares; n uses the true element count).
    block_elems = 8 * LANES
    rem = n_valid % block_elems
    if rem:
        pad = block_elems - rem
        sal_flat = jnp.pad(sal_flat, (0, pad))
        fix_flat = jnp.pad(fix_flat, (0, pad))

    n_rows = sal_flat.shape[0] // LANES
    sal2d = sal_flat.reshape(n_rows, LANES)
    fix2d = fix_flat.reshape(n_rows, LANES)

    tile_rows = min(max_tile_rows, n_rows)   # n_rows % 8 == 0 => tile_rows % 8 == 0
    grid = (pl.cdiv(n_rows, tile_rows),)

    kernel = functools.partial(
        _nss_kernel, n_valid=n_valid, n_rows=n_rows, tile_rows=tile_rows)

    out = pl.pallas_call(
        kernel,
        out_shape=jax.ShapeDtypeStruct((1, 1), jnp.float32),
        grid_spec=pltpu.PrefetchScalarGridSpec(
            num_scalar_prefetch=0,
            grid=grid,
            in_specs=[
                pl.BlockSpec((tile_rows, LANES), lambda i: (i, 0)),
                pl.BlockSpec((tile_rows, LANES), lambda i: (i, 0)),
            ],
            out_specs=pl.BlockSpec((1, 1), lambda i: (0, 0)),
            scratch_shapes=[
                # rows: [sum(x), sum(x^2), masked_sum(x), masked_count]
                pltpu.VMEM((4, 8, LANES), jnp.float32),
            ],
        ),
        compiler_params=pltpu.CompilerParams(
            dimension_semantics=("arbitrary",),
        ),
    )(sal2d, fix2d)
    return out[0, 0]


def nss_loss_ref(sal_map, fix):
    """Pure-JAX reference mirroring the PyTorch forward."""
    mask = fix > 0.5
    mean = jnp.mean(sal_map)
    std = jnp.std(sal_map, ddof=1)  # torch.std default is unbiased
    z = (sal_map - mean) / std
    return jnp.sum(jnp.where(mask, z, 0.0)) / jnp.sum(mask)


if __name__ == "__main__":
    key = jax.random.PRNGKey(0)
    k1, k2 = jax.random.split(key)
    # NCHW-shaped inputs, same size for both => no interpolate branch
    sal_map = jax.random.normal(k1, (2, 4, 16, 16), dtype=jnp.float32)
    fix = jax.random.uniform(k2, (2, 4, 16, 16), dtype=jnp.float32)

    out = nss_loss(sal_map, fix)
    out = jax.block_until_ready(out)

    ref = nss_loss_ref(sal_map, fix)
    assert jnp.allclose(out, ref, rtol=1e-4, atol=1e-5), (out, ref)
    print("KERNEL_OK")
</pallas_src>

<mosaic_0001>
module attributes {stable_mosaic.version = 11 : i64} {
  func.func @_nss_kernel(%arg0: i32, %arg1: memref<16x128xf32, #tpu.memory_space<vmem>>, %arg2: memref<16x128xf32, #tpu.memory_space<vmem>>, %arg3: memref<1x1xf32, #tpu.memory_space<vmem>>, %arg4: memref<4x8x128xf32, #tpu.memory_space<vmem>>) attributes {dimension_semantics = [#tpu.dimension_semantics<arbitrary>], iteration_bounds = array<i64: 1>, scalar_prefetch = 0 : i64, scratch_operands = 1 : i64, tpu.core_type = #tpu.core_type<tc>, window_params = [{transform_indices = @transform_0, window_bounds = array<i64: 16, 128>}, {transform_indices = @transform_1, window_bounds = array<i64: 16, 128>}, {pipeline_mode = #tpu.pipeline_mode<synchronous>, transform_indices = @transform_2, window_bounds = array<i64: 1, 1>}]} {
    %c0_i32 = arith.constant 0 : i32
    %0 = arith.cmpi eq, %arg0, %c0_i32 : i32
    %1 = arith.extui %0 : i1 to i32
    %c0_i32_0 = arith.constant 0 : i32
    %2 = arith.cmpi ne, %1, %c0_i32_0 : i32
    scf.if %2 {
      %cst_34 = arith.constant 0.000000e+00 : f32
      %48 = vector.broadcast %cst_34 : f32 to vector<4x8x128xf32>
      %c0_35 = arith.constant 0 : index
      %c0_36 = arith.constant 0 : index
      %c0_37 = arith.constant 0 : index
      %49 = vector.load %arg4[%c0_35, %c0_36, %c0_37] : memref<4x8x128xf32, #tpu.memory_space<vmem>>, vector<4x8x128xf32>
      tpu.vector_store %arg4[%c0_35, %c0_36, %c0_37], %48 {strides = array<i32>} : memref<4x8x128xf32, #tpu.memory_space<vmem>>, vector<4x8x128xf32>,
    } else {
    }
    %c0 = arith.constant 0 : index
    %c0_1 = arith.constant 0 : index
    %3 = vector.load %arg1[%c0, %c0_1] : memref<16x128xf32, #tpu.memory_space<vmem>>, vector<16x128xf32>
    %c0_2 = arith.constant 0 : index
    %c0_3 = arith.constant 0 : index
    %4 = vector.load %arg2[%c0_2, %c0_3] : memref<16x128xf32, #tpu.memory_space<vmem>>, vector<16x128xf32>
    %cst = arith.constant 5.000000e-01 : f32
    %5 = vector.broadcast %cst : f32 to vector<16x128xf32>
    %6 = arith.cmpf ogt, %4, %5 : vector<16x128xf32>
    %cst_4 = arith.constant 0.000000e+00 : f32
    %7 = vector.broadcast %cst_4 : f32 to vector<16x128xf32>
    %8 = arith.select %6, %3, %7 : vector<16x128xi1>, vector<16x128xf32>
    %cst_5 = arith.constant 1.000000e+00 : f32
    %cst_6 = arith.constant 0.000000e+00 : f32
    %9 = vector.broadcast %cst_5 : f32 to vector<16x128xf32>
    %10 = vector.broadcast %cst_6 : f32 to vector<16x128xf32>
    %11 = arith.select %6, %9, %10 : vector<16x128xi1>, vector<16x128xf32>
    %c0_7 = arith.constant 0 : index
    %c0_8 = arith.constant 0 : index
    %c0_9 = arith.constant 0 : index
    %12 = vector.load %arg4[%c0_7, %c0_8, %c0_9] : memref<4x8x128xf32, #tpu.memory_space<vmem>>, vector<1x8x128xf32>
    %13 = vector.shape_cast %12 : vector<1x8x128xf32> to vector<8x128xf32>
    %14 = vector.shape_cast %3 : vector<16x128xf32> to vector<2x8x128xf32>
    %cst_10 = arith.constant dense<0.000000e+00> : vector<8x128xf32>
    %15 = vector.multi_reduction <add>, %14, %cst_10 [0] : vector<2x8x128xf32> to vector<8x128xf32>
    %16 = arith.addf %13, %15 : vector<8x128xf32>
    %c0_11 = arith.constant 0 : index
    %c0_12 = arith.constant 0 : index
    %c0_13 = arith.constant 0 : index
    %17 = vector.load %arg4[%c0_11, %c0_12, %c0_13] : memref<4x8x128xf32, #tpu.memory_space<vmem>>, vector<1x8x128xf32>
    %18 = vector.shape_cast %17 : vector<1x8x128xf32> to vector<8x128xf32>
    %19 = vector.shape_cast %16 : vector<8x128xf32> to vector<1x8x128xf32>
    tpu.vector_store %arg4[%c0_11, %c0_12, %c0_13], %19 {strides = array<i32>} : memref<4x8x128xf32, #tpu.memory_space<vmem>>, vector<1x8x128xf32>,
    %c1 = arith.constant 1 : index
    %c0_14 = arith.constant 0 : index
    %c0_15 = arith.constant 0 : index
    %20 = vector.load %arg4[%c1, %c0_14, %c0_15] : memref<4x8x128xf32, #tpu.memory_space<vmem>>, vector<1x8x128xf32>
    %21 = vector.shape_cast %20 : vector<1x8x128xf32> to vector<8x128xf32>
    %22 = arith.mulf %3, %3 : vector<16x128xf32>
    %23 = vector.shape_cast %22 : vector<16x128xf32> to vector<2x8x128xf32>
    %cst_16 = arith.constant dense<0.000000e+00> : vector<8x128xf32>
    %24 = vector.multi_reduction <add>, %23, %cst_16 [0] : vector<2x8x128xf32> to vector<8x128xf32>
    %25 = arith.addf %21, %24 : vector<8x128xf32>
    %c1_17 = arith.constant 1 : index
    %c0_18 = arith.constant 0 : index
    %c0_19 = arith.constant 0 : index
    %26 = vector.load %arg4[%c1_17, %c0_18, %c0_19] : memref<4x8x128xf32, #tpu.memory_space<vmem>>, vector<1x8x128xf32>
    %27 = vector.shape_cast %26 : vector<1x8x128xf32> to vector<8x128xf32>
    %28 = vector.shape_cast %25 : vector<8x128xf32> to vector<1x8x128xf32>
    tpu.vector_store %arg4[%c1_17, %c0_18, %c0_19], %28 {strides = array<i32>} : memref<4x8x128xf32, #tpu.memory_space<vmem>>, vector<1x8x128xf32>,
    %c2 = arith.constant 2 : index
    %c0_20 = arith.constant 0 : index
    %c0_21 = arith.constant 0 : index
    %29 = vector.load %arg4[%c2, %c0_20, %c0_21] : memref<4x8x128xf32, #tpu.memory_space<vmem>>, vector<1x8x128xf32>
    %30 = vector.shape_cast %29 : vector<1x8x128xf32> to vector<8x128xf32>
    %31 = vector.shape_cast %8 : vector<16x128xf32> to vector<2x8x128xf32>
    %cst_22 = arith.constant dense<0.000000e+00> : vector<8x128xf32>
    %32 = vector.multi_reduction <add>, %31, %cst_22 [0] : vector<2x8x128xf32> to vector<8x128xf32>
    %33 = arith.addf %30, %32 : vector<8x128xf32>
    %c2_23 = arith.constant 2 : index
    %c0_24 = arith.constant 0 : index
    %c0_25 = arith.constant 0 : index
    %34 = vector.load %arg4[%c2_23, %c0_24, %c0_25] : memref<4x8x128xf32, #tpu.memory_space<vmem>>, vector<1x8x128xf32>
    %35 = vector.shape_cast %34 : vector<1x8x128xf32> to vector<8x128xf32>
    %36 = vector.shape_cast %33 : vector<8x128xf32> to vector<1x8x128xf32>
    tpu.vector_store %arg4[%c2_23, %c0_24, %c0_25], %36 {strides = array<i32>} : memref<4x8x128xf32, #tpu.memory_space<vmem>>, vector<1x8x128xf32>,
    %c3 = arith.constant 3 : index
    %c0_26 = arith.constant 0 : index
    %c0_27 = arith.constant 0 : index
    %37 = vector.load %arg4[%c3, %c0_26, %c0_27] : memref<4x8x128xf32, #tpu.memory_space<vmem>>, vector<1x8x128xf32>
    %38 = vector.shape_cast %37 : vector<1x8x128xf32> to vector<8x128xf32>
    %39 = vector.shape_cast %11 : vector<16x128xf32> to vector<2x8x128xf32>
    %cst_28 = arith.constant dense<0.000000e+00> : vector<8x128xf32>
    %40 = vector.multi_reduction <add>, %39, %cst_28 [0] : vector<2x8x128xf32> to vector<8x128xf32>
    %41 = arith.addf %38, %40 : vector<8x128xf32>
    %c3_29 = arith.constant 3 : index
    %c0_30 = arith.constant 0 : index
    %c0_31 = arith.constant 0 : index
    %42 = vector.load %arg4[%c3_29, %c0_30, %c0_31] : memref<4x8x128xf32, #tpu.memory_space<vmem>>, vector<1x8x128xf32>
    %43 = vector.shape_cast %42 : vector<1x8x128xf32> to vector<8x128xf32>
    %44 = vector.shape_cast %41 : vector<8x128xf32> to vector<1x8x128xf32>
    tpu.vector_store %arg4[%c3_29, %c0_30, %c0_31], %44 {strides = array<i32>} : memref<4x8x128xf32, #tpu.memory_space<vmem>>, vector<1x8x128xf32>,
    %c0_i32_32 = arith.constant 0 : i32
    %45 = arith.cmpi eq, %arg0, %c0_i32_32 : i32
    %46 = arith.extui %45 : i1 to i32
    %c0_i32_33 = arith.constant 0 : i32
    %47 = arith.cmpi ne, %46, %c0_i32_33 : i32
    scf.if %47 {
      %c0_34 = arith.constant 0 : index
      %c0_35 = arith.constant 0 : index
      %c0_36 = arith.constant 0 : index
      %48 = vector.load %arg4[%c0_34, %c0_35, %c0_36] : memref<4x8x128xf32, #tpu.memory_space<vmem>>, vector<1x8x128xf32>
      %49 = vector.shape_cast %48 : vector<1x8x128xf32> to vector<8x128xf32>
      %50 = vector.shape_cast %49 : vector<8x128xf32> to vector<1x8x128xf32>
      %cst_37 = arith.constant dense<0.000000e+00> : vector<1xf32>
      %51 = vector.multi_reduction <add>, %50, %cst_37 [1, 2] : vector<1x8x128xf32> to vector<1xf32>
      %52 = vector.shape_cast %51 : vector<1xf32> to vector<1x1x1xf32>
      %53 = vector.extract %52[0, 0, 0] : f32 from vector<1x1x1xf32>
      %54 = vector.broadcast %53 : f32 to vector<1x1xf32>
      %c1_38 = arith.constant 1 : index
      %c0_39 = arith.constant 0 : index
      %c0_40 = arith.constant 0 : index
      %55 = vector.load %arg4[%c1_38, %c0_39, %c0_40] : memref<4x8x128xf32, #tpu.memory_space<vmem>>, vector<1x8x128xf32>
      %56 = vector.shape_cast %55 : vector<1x8x128xf32> to vector<8x128xf32>
      %57 = vector.shape_cast %56 : vector<8x128xf32> to vector<1x8x128xf32>
      %cst_41 = arith.constant dense<0.000000e+00> : vector<1xf32>
      %58 = vector.multi_reduction <add>, %57, %cst_41 [1, 2] : vector<1x8x128xf32> to vector<1xf32>
      %59 = vector.shape_cast %58 : vector<1xf32> to vector<1x1x1xf32>
      %60 = vector.extract %59[0, 0, 0] : f32 from vector<1x1x1xf32>
      %61 = vector.broadcast %60 : f32 to vector<1x1xf32>
      %c2_42 = arith.constant 2 : index
      %c0_43 = arith.constant 0 : index
      %c0_44 = arith.constant 0 : index
      %62 = vector.load %arg4[%c2_42, %c0_43, %c0_44] : memref<4x8x128xf32, #tpu.memory_space<vmem>>, vector<1x8x128xf32>
      %63 = vector.shape_cast %62 : vector<1x8x128xf32> to vector<8x128xf32>
      %64 = vector.shape_cast %63 : vector<8x128xf32> to vector<1x8x128xf32>
      %cst_45 = arith.constant dense<0.000000e+00> : vector<1xf32>
      %65 = vector.multi_reduction <add>, %64, %cst_45 [1, 2] : vector<1x8x128xf32> to vector<1xf32>
      %66 = vector.shape_cast %65 : vector<1xf32> to vector<1x1x1xf32>
      %67 = vector.extract %66[0, 0, 0] : f32 from vector<1x1x1xf32>
      %68 = vector.broadcast %67 : f32 to vector<1x1xf32>
      %c3_46 = arith.constant 3 : index
      %c0_47 = arith.constant 0 : index
      %c0_48 = arith.constant 0 : index
      %69 = vector.load %arg4[%c3_46, %c0_47, %c0_48] : memref<4x8x128xf32, #tpu.memory_space<vmem>>, vector<1x8x128xf32>
      %70 = vector.shape_cast %69 : vector<1x8x128xf32> to vector<8x128xf32>
      %71 = vector.shape_cast %70 : vector<8x128xf32> to vector<1x8x128xf32>
      %cst_49 = arith.constant dense<0.000000e+00> : vector<1xf32>
      %72 = vector.multi_reduction <add>, %71, %cst_49 [1, 2] : vector<1x8x128xf32> to vector<1xf32>
      %73 = vector.shape_cast %72 : vector<1xf32> to vector<1x1x1xf32>
      %74 = vector.extract %73[0, 0, 0] : f32 from vector<1x1x1xf32>
      %75 = vector.broadcast %74 : f32 to vector<1x1xf32>
      %cst_50 = arith.constant 2.048000e+03 : f32
      %76 = vector.broadcast %cst_50 : f32 to vector<1x1xf32>
      %77 = arith.divf %54, %76 : vector<1x1xf32>
      %cst_51 = arith.constant 2.048000e+03 : f32
      %78 = vector.broadcast %cst_51 : f32 to vector<1x1xf32>
      %79 = arith.mulf %78, %77 : vector<1x1xf32>
      %80 = arith.mulf %79, %77 : vector<1x1xf32>
      %81 = arith.subf %61, %80 : vector<1x1xf32>
      %cst_52 = arith.constant 2.048000e+03 : f32
      %cst_53 = arith.constant 1.000000e+00 : f32
      %82 = arith.subf %cst_52, %cst_53 : f32
      %83 = vector.broadcast %82 : f32 to vector<1x1xf32>
      %84 = arith.divf %81, %83 : vector<1x1xf32>
      %85 = math.sqrt %84 : vector<1x1xf32>
      %86 = arith.divf %68, %75 : vector<1x1xf32>
      %87 = arith.subf %86, %77 : vector<1x1xf32>
      %88 = arith.divf %87, %85 : vector<1x1xf32>
      %c0_54 = arith.constant 0 : index
      %c0_55 = arith.constant 0 : index
      %89 = vector.load %arg3[%c0_54, %c0_55] : memref<1x1xf32, #tpu.memory_space<vmem>>, vector<1x1xf32>
      tpu.vector_store %arg3[%c0_54, %c0_55], %88 {strides = array<i32>} : memref<1x1xf32, #tpu.memory_space<vmem>>, vector<1x1xf32>,
    } else {
    }
    return
  }
  func.func @transform_0(%arg0: i32) -> (i32, i32) {
    %c0_i32 = arith.constant 0 : i32
    %c0_i32_0 = arith.constant 0 : i32
    return %arg0, %c0_i32 : i32, i32
  }
  func.func @transform_1(%arg0: i32) -> (i32, i32) {
    %c0_i32 = arith.constant 0 : i32
    %c0_i32_0 = arith.constant 0 : i32
    return %arg0, %c0_i32 : i32, i32
  }
  func.func @transform_2(%arg0: i32) -> (i32, i32) {
    %c0_i32 = arith.constant 0 : i32
    %c0_i32_0 = arith.constant 0 : i32
    %c0_i32_1 = arith.constant 0 : i32
    return %c0_i32, %c0_i32_0 : i32, i32
  }
}

</mosaic_0001>

<llo_original>
// kernel: tpu_custom_call.1
$region0: #{tpu_custom_call.1}
  #allocation0 [shape = 'u32[]', space=smem, size = 0x4, offset = 0x4, fixed_abs, tag = 'smem constant byte address 0x4 - core index']
  #allocation1 [shape = 'u32[144,128]{1,0:T(1,128)}', space=vmem, size = 0x12000, scoped, tag = 'internal scratch']
  #allocation2 [shape = 'f32[4,8,128]{2,1,0:T(8,128)}', space=vmem, size = 0x4000, scoped, tag = 'scratch operand']
  %s0 = inlined_call_operand.hbm [shape: f32[16,128], index: 0, kind: input, shape index: {}]
  %s1 = inlined_call_operand.hbm [shape: f32[16,128], index: 1, kind: input, shape index: {}]
  %s2 = inlined_call_operand.hbm [shape: f32[1,1], index: 2, kind: output, shape index: {}]
  %s3 = sld [smem:[#allocation0]]
  $region34: #{tpu_custom_call.1} parent=0
    _
  %s5 = ssub.s32 1, %s3
  %s6 = scalar_select 0, %s5, %s3
  $region1: #{tpu_custom_call.1} parent=0
    #allocation3 [shape = 'u8[8192]{0}', space=vmem, size = 0x2000, scoped, tag = 'input window, operand 0, single buffered']
    #allocation4 [shape = 's32[1]{0}', space=sflag, size = 0x4, scoped, tag = 'scoped memory for tpu_custom_call.1']
    #allocation5 [shape = 's32[1]{0}', space=sflag, size = 0x4, scoped, tag = 'scoped memory for tpu_custom_call.1']
    #allocation6 [shape = 'u8[8192]{0}', space=vmem, size = 0x2000, scoped, tag = 'input window, operand 1, single buffered']
    #allocation7 [shape = 's32[1]{0}', space=sflag, size = 0x4, scoped, tag = 'scoped memory for tpu_custom_call.1']
    #allocation8 [shape = 'u8[512]{0}', space=vmem, size = 0x400, scoped, tag = 'output window, operand 0, single buffered']
    %7 = vsyncpa [#allocation4], 0
    %8 = vsyncpa [#allocation7], 0
    %9 = vsyncpa [#allocation5], 0
    // Predicated region
    $region2: #{tpu_custom_call.1} parent=1 // pred_check
      _
    $region3: #{tpu_custom_call.1} parent=1 // pred_check_branch
      %11 = sbr.rel (0) target = $region5
    $region4: #{tpu_custom_call.1} parent=1 // pred_region
      %s13 = ssub.s32 256, 256
      %14 = vsyncadd [#allocation4], %s13
      %s15 = sshll.u32 [#allocation3], 4
      %s16 = int_to_ptr.vmem [resolvable:$true] %s15
      %21 = dma.hbm_to_vmem [thread:$0]  %s0, 256, %s16, [#allocation4], 128, 128, 8
    $region5: #{tpu_custom_call.1} parent=1 // pred_fallthru
      _
    // Predicated region
    $region6: #{tpu_custom_call.1} parent=1 // pred_check
      _
    $region7: #{tpu_custom_call.1} parent=1 // pred_check_branch
      %23 = sbr.rel (0) target = $region9
    $region8: #{tpu_custom_call.1} parent=1 // pred_region
      %s25 = ssub.s32 256, 256
      %26 = vsyncadd [#allocation7], %s25
      %s27 = sshll.u32 [#allocation6], 4
      %s28 = int_to_ptr.vmem [resolvable:$true] %s27
      %33 = dma.hbm_to_vmem [thread:$0]  %s1, 256, %s28, [#allocation7], 128, 128, 8
    $region9: #{tpu_custom_call.1} parent=1 // pred_fallthru
      _
    // Predicated region
    $region10: #{tpu_custom_call.1} parent=1 // pred_check
      _
    $region11: #{tpu_custom_call.1} parent=1 // pred_check_branch
      %35 = sbr.rel (0) target = $region13
    $region12: #{tpu_custom_call.1} parent=1 // pred_region
      %36 = dma.done [#allocation4], 256
    $region13: #{tpu_custom_call.1} parent=1 // pred_fallthru
      _
    // Predicated region
    $region14: #{tpu_custom_call.1} parent=1 // pred_check
      _
    $region15: #{tpu_custom_call.1} parent=1 // pred_check_branch
      %38 = sbr.rel (0) target = $region17
    $region16: #{tpu_custom_call.1} parent=1 // pred_region
      %39 = dma.done [#allocation7], 256
    $region17: #{tpu_custom_call.1} parent=1 // pred_fallthru
      _
    %p40 = scmp.eq.s32.totalorder 0, 0
    // Predicated region
    $region18: #{tpu_custom_call.1} parent=1 // pred_check
      %p41 = pneg %p40
    $region19: #{tpu_custom_call.1} parent=1 // pred_check_branch
      %43 = sbr.rel (%p41) target = $region21
    $region20: #{tpu_custom_call.1} parent=1 // pred_region
      %44 = vst [vmem:[#allocation2] sm:$0xff] 0.0
      %45 = vst [vmem:[#allocation2 + $0x8] sm:$0xff] 0.0
      %46 = vst [vmem:[#allocation2 + $0x10] sm:$0xff] 0.0
      %47 = vst [vmem:[#allocation2 + $0x18] sm:$0xff] 0.0
    $region21: #{tpu_custom_call.1} parent=1 // pred_fallthru
      _
    %v48 = vld [vmem:[#allocation3] sm:$0xff]
    %v49 = vld [vmem:[#allocation3 + $0x8] sm:$0xff]
    %v50 = vld [vmem:[#allocation6] sm:$0xff]
    %v51 = vld [vmem:[#allocation6 + $0x8] sm:$0xff]
    %vm52 = vcmp.gt.f32.partialorder %v50, 0.5
    %vm53 = vcmp.gt.f32.partialorder %v51, 0.5
    %v54 = vsel %vm52, %v48, 0.0
    %v55 = vsel %vm53, %v49, 0.0
    %v56 = vsel %vm52, 1.0, 0.0
    %v57 = vsel %vm53, 1.0, 0.0
    %v58 = vld [vmem:[#allocation2] sm:$0xff]
    %v59 = vadd.f32 %v48, %v49
    %v60 = vadd.f32 %v58, %v59
    %61 = vst [vmem:[#allocation2] sm:$0xff] %v60
    %s62 = scalar_lea.vmem [#allocation2], 8
    %v63 = vld [vmem:[%s62] sm:$0xff]
    %v64 = vmul.f32 %v48, %v48
    %v65 = vmul.f32 %v49, %v49
    %v66 = vadd.f32 %v64, %v65
    %v67 = vadd.f32 %v63, %v66
    %68 = vst [vmem:[%s62] sm:$0xff] %v67
    %s69 = scalar_lea.vmem [#allocation2], 16
    %v70 = vld [vmem:[%s69] sm:$0xff]
    %v71 = vadd.f32 %v54, %v55
    %v72 = vadd.f32 %v70, %v71
    %73 = vst [vmem:[%s69] sm:$0xff] %v72
    %s74 = scalar_lea.vmem [#allocation2], 24
    %v75 = vld [vmem:[%s74] sm:$0xff]
    %v76 = vadd.f32 %v56, %v57
    %v77 = vadd.f32 %v75, %v76
    %78 = vst [vmem:[%s74] sm:$0xff] %v77
    // Predicated region
    $region22: #{tpu_custom_call.1} parent=1 // pred_check
      %p79 = pneg %p40
    $region23: #{tpu_custom_call.1} parent=1 // pred_check_branch
      %81 = sbr.rel (%p79) target = $region25
    $region24: #{tpu_custom_call.1} parent=1 // pred_region
      %v82 = vld [vmem:[#allocation2] sm:$0xff]
      %83 = vadd.xlane.f32.xlu0 %v82
      %v84 = vpop.xlane.xlu0 %83
      %v85 = vrot.slane %v84, 4
      %v86 = vadd.f32 %v84, %v85
      %v87 = vrot.slane %v86, 2
      %v88 = vadd.f32 %v86, %v87
      %v89 = vrot.slane %v88, 1
      %v90 = vadd.f32 %v88, %v89
      %s91 = vtos %v90
      %v92 = vstv %s91
      %v93 = vld [vmem:[%s62] sm:$0xff]
      %94 = vadd.xlane.f32.xlu0 %v93
      %v95 = vpop.xlane.xlu0 %94
      %v96 = vrot.slane %v95, 4
      %v97 = vadd.f32 %v95, %v96
      %v98 = vrot.slane %v97, 2
      %v99 = vadd.f32 %v97, %v98
      %v100 = vrot.slane %v99, 1
      %v101 = vadd.f32 %v99, %v100
      %s102 = vtos %v101
      %v103 = vstv %s102
      %v104 = vld [vmem:[%s69] sm:$0xff]
      %105 = vadd.xlane.f32.xlu0 %v104
      %v106 = vpop.xlane.xlu0 %105
      %v107 = vrot.slane %v106, 4
      %v108 = vadd.f32 %v106, %v107
      %v109 = vrot.slane %v108, 2
      %v110 = vadd.f32 %v108, %v109
      %v111 = vrot.slane %v110, 1
      %v112 = vadd.f32 %v110, %v111
      %s113 = vtos %v112
      %v114 = vstv %s113
      %v115 = vld [vmem:[%s74] sm:$0xff]
      %116 = vadd.xlane.f32.xlu0 %v115
      %v117 = vpop.xlane.xlu0 %116
      %v118 = vrot.slane %v117, 4
      %v119 = vadd.f32 %v117, %v118
      %v120 = vrot.slane %v119, 2
      %v121 = vadd.f32 %v119, %v120
      %v122 = vrot.slane %v121, 1
      %v123 = vadd.f32 %v121, %v122
      %s124 = vtos %v123
      %v125 = vstv %s124
      %v126 = vrcp.pop 2048.0
      %v127 = vmul.f32 %v92, %v126
      %v128 = vmul.f32 %v127, 2048.0
      %v129 = vmul.f32 %v128, %v127
      %v130 = vsub.f32 %v103, %v129
      %v131 = vrcp.pop 2047.0
      %v132 = vmul.f32 %v130, %v131
      %v133 = vrsqrt.pop %v132
      %v134 = vmul.f32 %v132, %v133
      %vm135 = vcmp.eq.f32.partialorder %v132, inf
      %v136 = vsel %vm135, %v132, %v134
      %vm137 = vcmp.eq.f32.partialorder %v132, 0.0
      %v138 = vand.u32 %v132, 2147483648
      %v139 = vsel %vm137, %v138, %v136
      %v140 = vrcp.pop %v125
      %v141 = vmul.f32 %v114, %v140
      %v142 = vsub.f32 %v141, %v127
      %v143 = vrcp.pop %v139
      %v144 = vmul.f32 %v142, %v143
      %vm145 = vcmask 0
      %146 = vst.msk [vmem:[#allocation8] sm:$0x1] %vm145, %v144
    $region25: #{tpu_custom_call.1} parent=1 // pred_fallthru
      _
    // Predicated region
    $region26: #{tpu_custom_call.1} parent=1 // pred_check
      _
    $region27: #{tpu_custom_call.1} parent=1 // pred_check_branch
      %148 = sbr.rel (0) target = $region29
    $region28: #{tpu_custom_call.1} parent=1 // pred_region
      %s150 = ssub.s32 16, 16
      %151 = vsyncadd [#allocation5], %s150
      %s153 = sshll.u32 [#allocation8], 4
      %s154 = int_to_ptr.vmem [resolvable:$true] %s153
      %156 = dma.vmem_to_hbm [thread:$0]  %s154, 16, %s2, [#allocation5]
    $region29: #{tpu_custom_call.1} parent=1 // pred_fallthru
      _
    // Predicated region
    $region30: #{tpu_custom_call.1} parent=1 // pred_check
      _
    $region31: #{tpu_custom_call.1} parent=1 // pred_check_branch
      %158 = sbr.rel (0) target = $region33
    $region32: #{tpu_custom_call.1} parent=1 // pred_region
      %159 = dma.done [#allocation5], 16
    $region33: #{tpu_custom_call.1} parent=1 // pred_fallthru
      _
    %160 = vsyncpa [#allocation4], 1
    %161 = vsyncpa [#allocation7], 1
    %162 = vsyncpa [#allocation5], 1

</llo_original>
